<compile_context>
chip_gen: v7x
topology: tpu7x:2x2x1
jax: 0.10.0
libtpu: 0.0.40
codegen_flags: <defaults>
</compile_context>

<pallas_src>
import jax
import jax.numpy as jnp
from jax import lax
from jax.experimental import pallas as pl
from jax.experimental.pallas import tpu as pltpu


# ----------------------------------------------------------------------------
# Linear projection: y = x @ w.T + b   (PyTorch nn.Linear semantics), tiled.
# ----------------------------------------------------------------------------
def _linear_kernel(x_ref, w_ref, b_ref, o_ref):
    # x_ref: (tm, Din), w_ref: (tn, Din), b_ref: (1, tn), o_ref: (tm, tn)
    y = lax.dot_general(
        x_ref[...], w_ref[...],
        dimension_numbers=(((1,), (1,)), ((), ())),   # contract on Din (w.T)
        preferred_element_type=jnp.float32,
    )
    o_ref[...] = (y + b_ref[...]).astype(o_ref.dtype)


def linear_pallas(x2d, w, b, *, tm=256, tn=256):
    """y = x2d @ w.T + b, tiled over (M, Dout)."""
    M, din = x2d.shape
    dout = w.shape[0]
    tm = min(tm, M)
    tn = min(tn, dout)
    grid = (pl.cdiv(M, tm), pl.cdiv(dout, tn))
    return pl.pallas_call(
        _linear_kernel,
        out_shape=jax.ShapeDtypeStruct((M, dout), jnp.float32),
        grid=grid,
        in_specs=[
            pl.BlockSpec((tm, din), lambda i, j: (i, 0)),
            pl.BlockSpec((tn, din), lambda i, j: (j, 0)),
            pl.BlockSpec((1, tn), lambda i, j: (0, j)),
        ],
        out_specs=pl.BlockSpec((tm, tn), lambda i, j: (i, j)),
        compiler_params=pltpu.CompilerParams(
            dimension_semantics=("parallel", "parallel"),
            vmem_limit_bytes=48 * 1024 * 1024,
        ),
    )(x2d, w, b.reshape(1, dout))


# ----------------------------------------------------------------------------
# Exponential-smoothing attention kernel.
#   out[b, t, h*HD+j] = sum_{l<=t} W[h,t,l] * xd[b, l, h*HD+j]
#                       + (1-alpha_h)^(t+1) * init_state[h, j]
# with xd the fused first difference of the projected input.
# ----------------------------------------------------------------------------
def _es_attention_kernel(w_ref, init_term_ref, init_flat_ref, x_ref, o_ref):
    # w_ref:         (H, TQ, N)  ES weights for this query tile (batch-indep.)
    # init_term_ref: (TQ, D)     (1-alpha)^(t+1) * init_state, (h d)-concat layout
    # init_flat_ref: (1, D)      init_state flattened to the (h d) feature layout
    # x_ref:         (G, N, D)   projected input for G batches
    # o_ref:         (G, TQ, D)  output, already in (b, n, (h d)) layout
    G, N, D = x_ref.shape
    H, TQ, _ = w_ref.shape
    HD = D // H

    init_flat = init_flat_ref[...]          # (1, D)
    init_term = init_term_ref[...]          # (TQ, D)

    # Fused first difference: xd[t] = x[t] - x[t-1],  xd[0] = x[0] - init_state.
    xds = []
    for g in range(G):
        x = x_ref[g]                                             # (N, D)
        x_prev = jnp.concatenate([init_flat, x[:-1, :]], axis=0)  # (N, D)
        xds.append(x - x_prev)

    # Per-head causal ES matmul. The G batches are packed side by side on the
    # MXU lane axis so the RHS is (N, G*HD) wide instead of (N, HD).
    for h in range(H):
        lo, hi = h * HD, (h + 1) * HD
        if G == 1:
            rhs = xds[0][:, lo:hi]                               # (N, HD)
        else:
            rhs = jnp.concatenate([xd[:, lo:hi] for xd in xds], axis=1)  # (N, G*HD)
        res = jnp.dot(w_ref[h], rhs, preferred_element_type=jnp.float32)  # (TQ, G*HD)
        for g in range(G):
            o_ref[g, :, lo:hi] = (
                res[:, g * HD:(g + 1) * HD] + init_term[:, lo:hi]
            ).astype(o_ref.dtype)


def es_attention_pallas(w_es, init_term, init_flat, x_in, *, heads):
    B, N, D = x_in.shape
    H = heads
    HD = D // H

    # Query-tile size: keep the double-buffered (H, TQ, N) W tile ~<= 16 MiB.
    tq_cap = max(8, (16 * 1024 * 1024) // (2 * H * N * 4))
    tq_cap = max(8, (tq_cap // 8) * 8)
    tq = min(N, 512, tq_cap)

    # Batch group: widen the MXU RHS (target a few hundred lanes) while keeping
    # the double-buffered (G, N, D) x-block small; G must divide B.
    G = 1
    while (B % (2 * G) == 0
           and 2 * G * HD <= 512
           and 2 * G * N * D * 4 * 2 <= 8 * 1024 * 1024):
        G *= 2

    grid = (B // G, pl.cdiv(N, tq))
    return pl.pallas_call(
        _es_attention_kernel,
        out_shape=jax.ShapeDtypeStruct((B, N, D), jnp.float32),
        grid=grid,
        in_specs=[
            pl.BlockSpec((H, tq, N), lambda bg, q: (0, q, 0)),   # W (batch-indep.)
            pl.BlockSpec((tq, D), lambda bg, q: (q, 0)),         # init term
            pl.BlockSpec((1, D), lambda bg, q: (0, 0)),          # init_state (flat)
            pl.BlockSpec((G, N, D), lambda bg, q: (bg, 0, 0)),   # projected x
        ],
        out_specs=pl.BlockSpec((G, tq, D), lambda bg, q: (bg, q, 0)),
        compiler_params=pltpu.CompilerParams(
            dimension_semantics=("parallel", "parallel"),
            vmem_limit_bytes=48 * 1024 * 1024,
        ),
    )(w_es, init_term, init_flat, x_in)


# ----------------------------------------------------------------------------
# Full MHESA forward.
# ----------------------------------------------------------------------------
def mhesa_forward(x, params, *, heads):
    b, n, d = x.shape

    # ---- batch-independent precompute (hoisted out of the kernel grid) ------
    alpha = jax.nn.sigmoid(params["alpha"].astype(jnp.float32))      # (H,)
    one_m = 1.0 - alpha                                              # (H,)
    t = jnp.arange(n, dtype=jnp.float32)
    diff = t[:, None] - t[None, :]                                   # (N, N)
    # W[h, t, l] = alpha_h * (1 - alpha_h)^(t-l)  for l <= t, else 0.
    # (exponent clamped BEFORE the pow so no overflow enters the where)
    w_es = jnp.where(
        diff[None, :, :] >= 0.0,
        alpha[:, None, None]
        * one_m[:, None, None] ** jnp.maximum(diff, 0.0)[None, :, :],
        0.0,
    ).astype(jnp.float32)                                            # (H, N, N)
    # init-state term laid out directly in the (h d)-concatenated feature dim.
    init_w = one_m[:, None] ** (t[None, :] + 1.0)                    # (H, N)
    init_term = init_w[:, :, None] * params["init_state"][:, None, :]  # (H, N, HD)
    init_term = init_term.transpose(1, 0, 2).reshape(n, d)           # (N, D)
    init_flat = params["init_state"].reshape(1, d)                   # (1, D)

    # ---- project_in ----------------------------------------------------------
    x_in = linear_pallas(x.reshape(b * n, d), params["w_in"], params["b_in"])
    x_in = x_in.reshape(b, n, d)

    # ---- ES attention (diff + causal ES matmul + init term fused in-kernel,
    #      output already in (b, n, (h d)) layout — no transposes) -------------
    # TODO(synk): dropout on the ES weights is omitted (p = 0.0 -> identity).
    out = es_attention_pallas(w_es, init_term, init_flat, x_in, heads=heads)

    # ---- project_out ---------------------------------------------------------
    y = linear_pallas(out.reshape(b * n, d), params["w_out"], params["b_out"])
    return y.reshape(b, n, d)


# ----------------------------------------------------------------------------
# Pure-JAX reference (independent recurrence formulation) for validation.
# ----------------------------------------------------------------------------
def mhesa_reference(x, params, *, heads):
    b, n, d = x.shape
    hd = d // heads
    x_in = x.reshape(b * n, d) @ params["w_in"].T + params["b_in"]
    xh = x_in.reshape(b, n, heads, hd).transpose(0, 2, 1, 3)          # b h n hd
    init = jnp.broadcast_to(params["init_state"][None, :, None, :],
                            (b, heads, 1, hd))
    xcat = jnp.concatenate([init, xh], axis=2)
    xd = xcat[:, :, 1:] - xcat[:, :, :-1]

    a = jax.nn.sigmoid(params["alpha"]).reshape(1, heads, 1)          # (1, h, 1)

    def step(carry, xt):                                              # xt: (b, h, hd)
        o = (1.0 - a) * carry + a * xt
        return o, o

    init_o = jnp.broadcast_to(params["init_state"][None], (b, heads, hd))
    _, outs = lax.scan(step, init_o, jnp.moveaxis(xd, 2, 0))
    out = jnp.moveaxis(outs, 0, 2)                                    # b h n hd
    out = out.transpose(0, 2, 1, 3).reshape(b, n, d)
    y = out.reshape(b * n, d) @ params["w_out"].T + params["b_out"]
    return y.reshape(b, n, d)


# ----------------------------------------------------------------------------
if __name__ == "__main__":
    B, N, D, H = 2, 8, 32, 4
    HD = D // H

    key = jax.random.PRNGKey(0)
    ks = jax.random.split(key, 7)
    x = jax.random.normal(ks[0], (B, N, D), jnp.float32)

    # Deterministic synthetic parameters (shapes from MHESA.__init__)
    params = dict(
        init_state=jax.random.normal(ks[1], (H, HD), jnp.float32),
        alpha=jax.random.normal(ks[2], (H,), jnp.float32),
        w_in=jax.random.normal(ks[3], (D, D), jnp.float32) * (D ** -0.5),
        b_in=jax.random.normal(ks[4], (D,), jnp.float32) * 0.1,
        w_out=jax.random.normal(ks[5], (D, D), jnp.float32) * (D ** -0.5),
        b_out=jax.random.normal(ks[6], (D,), jnp.float32) * 0.1,
    )

    y = mhesa_forward(x, params, heads=H)
    y = jax.block_until_ready(y)

    y_ref = mhesa_reference(x, params, heads=H)
    assert y.shape == (B, N, D)
    assert jnp.allclose(y, y_ref, atol=1e-4, rtol=1e-4), "Pallas vs reference mismatch"

    print("KERNEL_OK")
</pallas_src>

<mosaic_0001>
module attributes {stable_mosaic.version = 11 : i64} {
  func.func @_linear_kernel(%arg0: i32, %arg1: i32, %arg2: memref<16x32xf32, #tpu.memory_space<vmem>>, %arg3: memref<32x32xf32, #tpu.memory_space<vmem>>, %arg4: memref<1x32xf32, #tpu.memory_space<vmem>>, %arg5: memref<16x32xf32, #tpu.memory_space<vmem>>) attributes {dimension_semantics = [#tpu.dimension_semantics<parallel>, #tpu.dimension_semantics<parallel>], iteration_bounds = array<i64: 1, 1>, scalar_prefetch = 0 : i64, scratch_operands = 0 : i64, tpu.core_type = #tpu.core_type<tc>, window_params = [{transform_indices = @transform_0, window_bounds = array<i64: 16, 32>}, {transform_indices = @transform_1, window_bounds = array<i64: 32, 32>}, {transform_indices = @transform_2, window_bounds = array<i64: 1, 32>}, {transform_indices = @transform_3, window_bounds = array<i64: 16, 32>}]} {
    %c0 = arith.constant 0 : index
    %c0_0 = arith.constant 0 : index
    %0 = vector.load %arg2[%c0, %c0_0] : memref<16x32xf32, #tpu.memory_space<vmem>>, vector<16x32xf32>
    %c0_1 = arith.constant 0 : index
    %c0_2 = arith.constant 0 : index
    %1 = vector.load %arg3[%c0_1, %c0_2] : memref<32x32xf32, #tpu.memory_space<vmem>>, vector<32x32xf32>
    %cst = arith.constant dense<0.000000e+00> : vector<16x32xf32>
    %2 = tpu.matmul %0, %1, %cst {dimension_numbers = #tpu.dot_dimension_numbers<[1], [1], [0], [0], [0, 0, 1, 0], [], []>} : vector<16x32xf32>, vector<32x32xf32>, vector<16x32xf32> -> vector<16x32xf32>
    %c0_3 = arith.constant 0 : index
    %c0_4 = arith.constant 0 : index
    %3 = vector.load %arg4[%c0_3, %c0_4] : memref<1x32xf32, #tpu.memory_space<vmem>>, vector<1x32xf32>
    %4 = vector.broadcast %3 : vector<1x32xf32> to vector<16x32xf32>
    %5 = arith.addf %2, %4 : vector<16x32xf32>
    %c0_5 = arith.constant 0 : index
    %c0_6 = arith.constant 0 : index
    %6 = vector.load %arg5[%c0_5, %c0_6] : memref<16x32xf32, #tpu.memory_space<vmem>>, vector<16x32xf32>
    tpu.vector_store %arg5[%c0_5, %c0_6], %5 {strides = array<i32>} : memref<16x32xf32, #tpu.memory_space<vmem>>, vector<16x32xf32>,
    return
  }
  func.func @transform_0(%arg0: i32, %arg1: i32) -> (i32, i32) {
    %c0_i32 = arith.constant 0 : i32
    %c0_i32_0 = arith.constant 0 : i32
    return %arg0, %c0_i32 : i32, i32
  }
  func.func @transform_1(%arg0: i32, %arg1: i32) -> (i32, i32) {
    %c0_i32 = arith.constant 0 : i32
    %c0_i32_0 = arith.constant 0 : i32
    return %arg1, %c0_i32 : i32, i32
  }
  func.func @transform_2(%arg0: i32, %arg1: i32) -> (i32, i32) {
    %c0_i32 = arith.constant 0 : i32
    %c0_i32_0 = arith.constant 0 : i32
    return %c0_i32, %arg1 : i32, i32
  }
  func.func @transform_3(%arg0: i32, %arg1: i32) -> (i32, i32) {
    %c0_i32 = arith.constant 0 : i32
    return %arg0, %arg1 : i32, i32
  }
}

</mosaic_0001>

<llo_original>
// kernel: tpu_custom_call.1
$region0: #{tpu_custom_call.1}
  #allocation0 [shape = 'u32[]', space=smem, size = 0x4, offset = 0x4, fixed_abs, tag = 'smem constant byte address 0x4 - core index']
  #allocation1 [shape = 'u32[144,128]{1,0:T(1,128)}', space=vmem, size = 0x12000, scoped, tag = 'internal scratch']
  %s0 = inlined_call_operand.hbm [shape: f32[16,32], index: 0, kind: input, shape index: {}]
  %s1 = inlined_call_operand.hbm [shape: f32[32,32], index: 1, kind: input, shape index: {}]
  %s2 = inlined_call_operand.vmem [shape: f32[1,32], index: 2, kind: input, shape index: {}]
  %s3 = inlined_call_operand.hbm [shape: f32[16,32], index: 3, kind: output, shape index: {}]
  %s4 = sld [smem:[#allocation0]]
  $region30: #{tpu_custom_call.1} parent=0
    _
  %s6 = ssub.s32 1, %s4
  %s7 = scalar_select 0, %s6, %s4
  $region1: #{tpu_custom_call.1} parent=0
    #allocation2 [shape = 'u8[8192]{0}', space=vmem, size = 0x2000, scoped, tag = 'input window, operand 0, single buffered']
    #allocation3 [shape = 's32[1]{0}', space=sflag, size = 0x4, scoped, tag = 'scoped memory for tpu_custom_call.1']
    #allocation4 [shape = 's32[1]{0}', space=sflag, size = 0x4, scoped, tag = 'scoped memory for tpu_custom_call.1']
    #allocation5 [shape = 'u8[16384]{0}', space=vmem, size = 0x4000, scoped, tag = 'input window, operand 1, single buffered']
    #allocation6 [shape = 's32[1]{0}', space=sflag, size = 0x4, scoped, tag = 'scoped memory for tpu_custom_call.1']
    #allocation7 [shape = 'u8[8192]{0}', space=vmem, size = 0x2000, scoped, tag = 'output window, operand 0, single buffered']
    %8 = vsyncpa [#allocation3], 0
    %9 = vsyncpa [#allocation6], 0
    %10 = vsyncpa [#allocation4], 0
    // Predicated region
    $region2: #{tpu_custom_call.1} parent=1 // pred_check
      _
    $region3: #{tpu_custom_call.1} parent=1 // pred_check_branch
      %12 = sbr.rel (0) target = $region5
    $region4: #{tpu_custom_call.1} parent=1 // pred_region
      %s14 = ssub.s32 256, 256
      %15 = vsyncadd [#allocation3], %s14
      %s16 = sshll.u32 [#allocation2], 4
      %s17 = int_to_ptr.vmem [resolvable:$true] %s16
      %22 = dma.hbm_to_vmem [thread:$0]  %s0, 256, %s17, [#allocation3], 128, 128, 8
    $region5: #{tpu_custom_call.1} parent=1 // pred_fallthru
      _
    // Predicated region
    $region6: #{tpu_custom_call.1} parent=1 // pred_check
      _
    $region7: #{tpu_custom_call.1} parent=1 // pred_check_branch
      %24 = sbr.rel (0) target = $region9
    $region8: #{tpu_custom_call.1} parent=1 // pred_region
      %s26 = ssub.s32 512, 512
      %27 = vsyncadd [#allocation6], %s26
      %s28 = sshll.u32 [#allocation5], 4
      %s29 = int_to_ptr.vmem [resolvable:$true] %s28
      %34 = dma.hbm_to_vmem [thread:$0]  %s1, 512, %s29, [#allocation6], 128, 128, 8
    $region9: #{tpu_custom_call.1} parent=1 // pred_fallthru
      _
    // Predicated region
    $region10: #{tpu_custom_call.1} parent=1 // pred_check
      _
    $region11: #{tpu_custom_call.1} parent=1 // pred_check_branch
      %36 = sbr.rel (0) target = $region13
    $region12: #{tpu_custom_call.1} parent=1 // pred_region
      _
    $region13: #{tpu_custom_call.1} parent=1 // pred_fallthru
      _
    // Predicated region
    $region14: #{tpu_custom_call.1} parent=1 // pred_check
      _
    $region15: #{tpu_custom_call.1} parent=1 // pred_check_branch
      %38 = sbr.rel (0) target = $region17
    $region16: #{tpu_custom_call.1} parent=1 // pred_region
      %39 = dma.done [#allocation3], 256
    $region17: #{tpu_custom_call.1} parent=1 // pred_fallthru
      _
    // Predicated region
    $region18: #{tpu_custom_call.1} parent=1 // pred_check
      _
    $region19: #{tpu_custom_call.1} parent=1 // pred_check_branch
      %41 = sbr.rel (0) target = $region21
    $region20: #{tpu_custom_call.1} parent=1 // pred_region
      %42 = dma.done [#allocation6], 512
    $region21: #{tpu_custom_call.1} parent=1 // pred_fallthru
      _
    %v43 = vld [vmem:[#allocation2] sm:$0xff]
    %v44 = vld [vmem:[#allocation2 + $0x8] sm:$0xff]
    %v45 = vld [vmem:[#allocation5] sm:$0xff]
    %v46 = vld [vmem:[#allocation5 + $0x8] sm:$0xff]
    %v47 = vld [vmem:[#allocation5 + $0x10] sm:$0xff]
    %v48 = vld [vmem:[#allocation5 + $0x18] sm:$0xff]
    %v49 = vld [vmem:[%s2] sm:$0x1]
    %v51 = vlaneseq
    %v52 = vshrl.u32 %v51, 7
    %v53 = vsub.s32 0, %v52
    %v54 = vrot.slane %v49, %v53
    %vm56 = vcmask 261120
    %v58 = vsel %vm56, %v43, 0
    %v61 = vsel %vm56, %v44, 0
    %v64 = vsel %vm56, %v45, 0
    %v67 = vsel %vm56, %v46, 0
    %v70 = vsel %vm56, %v47, 0
    %v73 = vsel %vm56, %v48, 0
    %75 = vmatprep.subr.mxu0 0.0
    %76 = vmatpush1.xpose.msra.mxu0 %v64
    %77 = vmatprep.subr.mxu0 0.0
    %78 = vmatpush1.xpose.msra.mxu0 %v67
    %79 = vmatprep.subr.mxu0 0.0
    %80 = vmatpush1.xpose.msra.mxu0 %v70
    %81 = vmatprep.subr.mxu0 0.0
    %82 = vmatpush1.xpose.msra.mxu0 %v73
    %83 = vmatprep.subr.mxu0 0.0
    %84 = vmatpush1.xpose.msra.mxu0 0.0
    %85 = vmatprep.subr.mxu0 0.0
    %86 = vmatpush1.xpose.msra.mxu0 0.0
    %87 = vmatprep.subr.mxu0 0.0
    %88 = vmatpush1.xpose.msra.mxu0 0.0
    %89 = vmatprep.subr.mxu0 0.0
    %90 = vmatpush1.xpose.msra.mxu0 0.0
    %91 = vmatprep.subr.mxu0 0.0
    %92 = vmatpush1.xpose.msra.mxu0 0.0
    %93 = vmatprep.subr.mxu0 0.0
    %94 = vmatpush1.xpose.msra.mxu0 0.0
    %95 = vmatprep.subr.mxu0 0.0
    %96 = vmatpush1.xpose.msra.mxu0 0.0
    %97 = vmatprep.subr.mxu0 0.0
    %98 = vmatpush1.xpose.msra.mxu0 0.0
    %99 = vmatprep.subr.mxu0 0.0
    %100 = vmatpush1.xpose.msra.mxu0 0.0
    %101 = vmatprep.subr.mxu0 0.0
    %102 = vmatpush1.xpose.msra.mxu0 0.0
    %103 = vmatprep.subr.mxu0 0.0
    %104 = vmatpush1.xpose.msra.mxu0 0.0
    %105 = vmatprep.subr.mxu0 0.0
    %106 = vmatpush1.xpose.msra.mxu0 0.0
    %107 = vmatprep.subr.mxu0 0.0
    %108 = vmatpush1.xpose.msra.mxu0 0.0
    %109 = vmatprep.subr.mxu0 0.0
    %110 = vmatpush1.xpose.msra.mxu0 0.0
    %111 = vmatprep.subr.mxu0 0.0
    %112 = vmatpush1.xpose.msra.mxu0 0.0
    %113 = vmatprep.subr.mxu0 0.0
    %114 = vmatpush1.xpose.msra.mxu0 0.0
    %115 = vmatprep.subr.mxu0 0.0
    %116 = vmatpush1.xpose.msra.mxu0 0.0
    %117 = vmatprep.subr.mxu0 0.0
    %118 = vmatpush1.xpose.msra.mxu0 0.0
    %119 = vmatprep.subr.mxu0 0.0
    %120 = vmatpush1.xpose.msra.mxu0 0.0
    %121 = vmatprep.subr.mxu0 0.0
    %122 = vmatpush1.xpose.msra.mxu0 0.0
    %123 = vmatprep.subr.mxu0 0.0
    %124 = vmatpush1.xpose.msra.mxu0 0.0
    %125 = vmatprep.subr.mxu0 0.0
    %126 = vmatpush1.xpose.msra.mxu0 0.0
    %127 = vmatprep.subr.mxu0 0.0
    %128 = vmatpush1.xpose.msra.mxu0 0.0
    %129 = vmatprep.subr.mxu0 0.0
    %130 = vmatpush1.xpose.msra.mxu0 0.0
    %131 = vmatprep.subr.mxu0 0.0
    %132 = vmatpush1.xpose.msra.mxu0 0.0
    %133 = vmatprep.subr.mxu0 0.0
    %134 = vmatpush1.xpose.msra.mxu0 0.0
    %135 = vmatprep.subr.mxu0 0.0
    %136 = vmatpush1.xpose.msra.mxu0 0.0
    %137 = vmatprep.subr.mxu0 0.0
    %138 = vmatpush1.xpose.msra.mxu0 0.0
    %139 = vmatprep.mubr.f32.mxu0 0.0
    %140 = vmatmul.mubr.f32.gmra.mrb[0].mxu0 %v58
    %v141 = vpop.f32.mrb[0].mxu0
    %v142 = vadd.f32 %v54, %v141
    %v143 = vpop.f32.mrb[0].mxu0
    %144 = vmatprep.mubr.f32.mxu0 0.0
    %145 = vmatmul.mubr.f32.gmra.mrb[0].mxu0 %v61
    %v146 = vpop.f32.mrb[0].mxu0
    %v147 = vadd.f32 %v54, %v146
    %v148 = vpop.f32.mrb[0].mxu0
    %149 = vdwg.mxu0
    %150 = vst.msk [vmem:[#allocation7] sm:$0xff] %vm56, %v142
    %151 = vst.msk [vmem:[#allocation7 + $0x8] sm:$0xff] %vm56, %v147
    // Predicated region
    $region22: #{tpu_custom_call.1} parent=1 // pred_check
      _
    $region23: #{tpu_custom_call.1} parent=1 // pred_check_branch
      %153 = sbr.rel (0) target = $region25
    $region24: #{tpu_custom_call.1} parent=1 // pred_region
      %s155 = ssub.s32 256, 256
      %156 = vsyncadd [#allocation4], %s155
      %s157 = sshll.u32 [#allocation7], 4
      %s158 = int_to_ptr.vmem [resolvable:$true] %s157
      %163 = dma.vmem_to_hbm [thread:$0]  %s158, 256, %s3, [#allocation4], 128, 128, 8
    $region25: #{tpu_custom_call.1} parent=1 // pred_fallthru
      _
    // Predicated region
    $region26: #{tpu_custom_call.1} parent=1 // pred_check
      _
    $region27: #{tpu_custom_call.1} parent=1 // pred_check_branch
      %165 = sbr.rel (0) target = $region29
    $region28: #{tpu_custom_call.1} parent=1 // pred_region
      %166 = dma.done [#allocation4], 256
    $region29: #{tpu_custom_call.1} parent=1 // pred_fallthru
      _
    %167 = vsyncpa [#allocation3], 1
    %168 = vsyncpa [#allocation6], 1
    %169 = vsyncpa [#allocation4], 1

</llo_original>
